<compile_context>
chip_gen: v5e
topology: v5e:2x2
jax: 0.10.0
libtpu: 0.0.40
codegen_flags: <defaults>
</compile_context>

<pallas_src>
import numpy as np
import jax
import jax.numpy as jnp
from jax.experimental import pallas as pl
from jax.experimental.pallas import tpu as pltpu


def ibug_kernel(preds_ref, targets_ref, w_ref, out_ref):
    # preds_ref / targets_ref: (2, B, N)  — coordinate plane, batch (sublanes), landmark (lanes)
    # w_ref: (1, N) merged eye weights (left one-hot/len - right one-hot/len)
    px, py = preds_ref[0], preds_ref[1]            # (B, N) each
    tx, ty = targets_ref[0], targets_ref[1]        # (B, N) each
    w = w_ref[...]                                 # (1, N)

    # mean over landmarks of per-landmark L2 distance
    dx = px - tx
    dy = py - ty
    per_lm = jnp.sqrt(dx * dx + dy * dy)                      # (B, N)
    me = jnp.mean(per_lm, axis=-1, keepdims=True)             # (B, 1)

    # inter-ocular distance: (mean left-eye pts) - (mean right-eye pts) as one
    # lane-wise weighted reduce per coordinate plane.
    ex = jnp.sum(tx * w, axis=-1, keepdims=True)              # (B, 1)
    ey = jnp.sum(ty * w, axis=-1, keepdims=True)              # (B, 1)
    d = jnp.sqrt(ex * ex + ey * ey)                           # (B, 1)

    # NOTE: no guard against d == 0 — matches reference semantics (inf/NaN).
    loss = me / d                                             # (B, 1)
    b = per_lm.shape[0]
    out_ref[0, 0] = (jnp.sum(loss) / float(b)) * 100.0        # reduction='mean', *100


def make_ibug_score(left_eye, right_eye, num_landmarks):
    """Builds the score fn once: hoists weight construction out of the call path."""
    w_np = np.zeros((1, num_landmarks), np.float32)
    w_np[0, np.asarray(left_eye)] += 1.0 / len(left_eye)
    w_np[0, np.asarray(right_eye)] -= 1.0 / len(right_eye)
    w = jnp.asarray(w_np)

    @jax.jit
    def score(preds, targets):
        # lane-dense layout: (B, N, C) -> (C, B, N); cast (if any) stays outside kernel
        p = jnp.transpose(preds.astype(jnp.float32), (2, 0, 1))
        t = jnp.transpose(targets.astype(jnp.float32), (2, 0, 1))
        out = pl.pallas_call(
            ibug_kernel,
            out_shape=jax.ShapeDtypeStruct((1, 1), jnp.float32),
            in_specs=[
                pl.BlockSpec(memory_space=pltpu.MemorySpace.VMEM),  # preds (C,B,N)
                pl.BlockSpec(memory_space=pltpu.MemorySpace.VMEM),  # targets (C,B,N)
                pl.BlockSpec(memory_space=pltpu.MemorySpace.VMEM),  # merged eye weights (1,N)
            ],
            out_specs=pl.BlockSpec(memory_space=pltpu.MemorySpace.SMEM),
        )(p, t, w)
        return out[0, 0]

    return score


def ibug_score_ref(preds, targets, left_eye, right_eye):
    # pure-JAX reference mirroring the PyTorch nme() semantics
    diff = preds - targets
    me = jnp.mean(jnp.linalg.norm(diff, axis=-1), axis=-1)
    leye = targets[..., jnp.asarray(left_eye), :]
    reye = targets[..., jnp.asarray(right_eye), :]
    mleye = leye.mean(axis=-2)
    mreye = reye.mean(axis=-2)
    d = jnp.linalg.norm(mleye - mreye, axis=-1)
    return jnp.mean(me / d) * 100.0


if __name__ == "__main__":
    # ibug-68 convention: left eye = landmarks 36..41, right eye = 42..47
    B, N, C = 4, 68, 2
    left_eye = list(range(36, 42))
    right_eye = list(range(42, 48))

    key = jax.random.PRNGKey(0)
    k1, k2 = jax.random.split(key)
    targets = jax.random.uniform(k1, (B, N, C), jnp.float32, 0.0, 64.0)
    preds = targets + jax.random.normal(k2, (B, N, C), jnp.float32) * 1.5

    score_fn = make_ibug_score(left_eye, right_eye, N)
    out = score_fn(preds, targets)
    out = jax.block_until_ready(out)

    ref = ibug_score_ref(preds, targets, left_eye, right_eye)
    assert np.allclose(np.asarray(out), np.asarray(ref), rtol=1e-5, atol=1e-5), (out, ref)

    print("KERNEL_OK")
</pallas_src>

<mosaic_0001>
module attributes {stable_mosaic.version = 11 : i64} {
  func.func @ibug_kernel(%arg0: memref<2x4x68xf32, #tpu.memory_space<vmem>>, %arg1: memref<2x4x68xf32, #tpu.memory_space<vmem>>, %arg2: memref<1x68xf32, #tpu.memory_space<vmem>>, %arg3: memref<1x1xf32, #tpu.memory_space<smem>>) attributes {dimension_semantics = [], scalar_prefetch = 0 : i64, scratch_operands = 0 : i64, tpu.core_type = #tpu.core_type<tc>} {
    %c0 = arith.constant 0 : index
    %c0_0 = arith.constant 0 : index
    %c0_1 = arith.constant 0 : index
    %0 = vector.load %arg0[%c0, %c0_0, %c0_1] : memref<2x4x68xf32, #tpu.memory_space<vmem>>, vector<1x4x68xf32>
    %1 = vector.shape_cast %0 : vector<1x4x68xf32> to vector<4x68xf32>
    %c1 = arith.constant 1 : index
    %c0_2 = arith.constant 0 : index
    %c0_3 = arith.constant 0 : index
    %2 = vector.load %arg0[%c1, %c0_2, %c0_3] : memref<2x4x68xf32, #tpu.memory_space<vmem>>, vector<1x4x68xf32>
    %3 = vector.shape_cast %2 : vector<1x4x68xf32> to vector<4x68xf32>
    %c0_4 = arith.constant 0 : index
    %c0_5 = arith.constant 0 : index
    %c0_6 = arith.constant 0 : index
    %4 = vector.load %arg1[%c0_4, %c0_5, %c0_6] : memref<2x4x68xf32, #tpu.memory_space<vmem>>, vector<1x4x68xf32>
    %5 = vector.shape_cast %4 : vector<1x4x68xf32> to vector<4x68xf32>
    %c1_7 = arith.constant 1 : index
    %c0_8 = arith.constant 0 : index
    %c0_9 = arith.constant 0 : index
    %6 = vector.load %arg1[%c1_7, %c0_8, %c0_9] : memref<2x4x68xf32, #tpu.memory_space<vmem>>, vector<1x4x68xf32>
    %7 = vector.shape_cast %6 : vector<1x4x68xf32> to vector<4x68xf32>
    %c0_10 = arith.constant 0 : index
    %c0_11 = arith.constant 0 : index
    %8 = vector.load %arg2[%c0_10, %c0_11] : memref<1x68xf32, #tpu.memory_space<vmem>>, vector<1x68xf32>
    %9 = arith.subf %1, %5 : vector<4x68xf32>
    %10 = arith.subf %3, %7 : vector<4x68xf32>
    %11 = arith.mulf %9, %9 : vector<4x68xf32>
    %12 = arith.mulf %10, %10 : vector<4x68xf32>
    %13 = arith.addf %11, %12 : vector<4x68xf32>
    %14 = math.sqrt %13 : vector<4x68xf32>
    %cst = arith.constant dense<0.000000e+00> : vector<4xf32>
    %15 = vector.multi_reduction <add>, %14, %cst [1] : vector<4x68xf32> to vector<4xf32>
    %16 = vector.shape_cast %15 : vector<4xf32> to vector<4x1xf32>
    %cst_12 = arith.constant 6.800000e+01 : f32
    %17 = vector.broadcast %cst_12 : f32 to vector<4x1xf32>
    %18 = arith.divf %16, %17 : vector<4x1xf32>
    %19 = vector.broadcast %8 : vector<1x68xf32> to vector<4x68xf32>
    %20 = arith.mulf %5, %19 : vector<4x68xf32>
    %cst_13 = arith.constant dense<0.000000e+00> : vector<4xf32>
    %21 = vector.multi_reduction <add>, %20, %cst_13 [1] : vector<4x68xf32> to vector<4xf32>
    %22 = vector.shape_cast %21 : vector<4xf32> to vector<4x1xf32>
    %23 = vector.broadcast %8 : vector<1x68xf32> to vector<4x68xf32>
    %24 = arith.mulf %7, %23 : vector<4x68xf32>
    %cst_14 = arith.constant dense<0.000000e+00> : vector<4xf32>
    %25 = vector.multi_reduction <add>, %24, %cst_14 [1] : vector<4x68xf32> to vector<4xf32>
    %26 = vector.shape_cast %25 : vector<4xf32> to vector<4x1xf32>
    %27 = arith.mulf %22, %22 : vector<4x1xf32>
    %28 = arith.mulf %26, %26 : vector<4x1xf32>
    %29 = arith.addf %27, %28 : vector<4x1xf32>
    %30 = math.sqrt %29 : vector<4x1xf32>
    %31 = arith.divf %18, %30 : vector<4x1xf32>
    %32 = vector.shape_cast %31 : vector<4x1xf32> to vector<1x4x1xf32>
    %cst_15 = arith.constant dense<0.000000e+00> : vector<1xf32>
    %33 = vector.multi_reduction <add>, %32, %cst_15 [1, 2] : vector<1x4x1xf32> to vector<1xf32>
    %34 = vector.shape_cast %33 : vector<1xf32> to vector<1x1x1xf32>
    %35 = vector.extract %34[0, 0, 0] : f32 from vector<1x1x1xf32>
    %cst_16 = arith.constant 4.000000e+00 : f32
    %36 = arith.divf %35, %cst_16 : f32
    %cst_17 = arith.constant 1.000000e+02 : f32
    %37 = arith.mulf %36, %cst_17 : f32
    %c0_18 = arith.constant 0 : index
    %c0_19 = arith.constant 0 : index
    %38 = memref.load %arg3[%c0_18, %c0_19] : memref<1x1xf32, #tpu.memory_space<smem>>
    memref.store %37, %arg3[%c0_18, %c0_19] : memref<1x1xf32, #tpu.memory_space<smem>>
    return
  }
}

</mosaic_0001>

<llo_original>
// kernel: score.1
$region0: #{score.1}
  #allocation0 [shape = 'u32[]', space=smem, size = 0x4, offset = 0x4, fixed_abs, tag = 'smem constant byte address 0x4 - core index']
  #allocation1 [shape = 'u32[72,128]{1,0:T(1,128)}', space=vmem, size = 0x9000, scoped, tag = 'internal scratch']
  %s0 = inlined_call_operand.vmem [shape: f32[2,4,68], index: 0, kind: input, shape index: {}]
  %s1 = inlined_call_operand.vmem [shape: f32[2,4,68], index: 1, kind: input, shape index: {}]
  %s2 = inlined_call_operand.vmem [shape: f32[1,68], index: 2, kind: input, shape index: {}]
  %s3 = inlined_call_operand.hbm [shape: f32[1,1], index: 3, kind: output, shape index: {}]
  %s4 = sld [smem:[#allocation0]]
  $region22: #{score.1} parent=0
    _
  %s6 = ssub.s32 1, %s4
  %s7 = scalar_select 0, %s6, %s4
  $region1: #{score.1} parent=0
    #allocation2 [shape = 'u8[512]{0}', space=smem, size = 0x200, scoped, tag = 'output window, operand 0, single buffered']
    #allocation3 [shape = 's32[1]{0}', space=sflag, size = 0x4, scoped, tag = 'scoped memory for score.1']
    %8 = vsyncpa [#allocation3], 0
    // Predicated region
    $region2: #{score.1} parent=1 // pred_check
      _
    $region3: #{score.1} parent=1 // pred_check_branch
      %10 = sbr.rel (0) target = $region5
    $region4: #{score.1} parent=1 // pred_region
      _
    $region5: #{score.1} parent=1 // pred_fallthru
      _
    // Predicated region
    $region6: #{score.1} parent=1 // pred_check
      _
    $region7: #{score.1} parent=1 // pred_check_branch
      %12 = sbr.rel (0) target = $region9
    $region8: #{score.1} parent=1 // pred_region
      _
    $region9: #{score.1} parent=1 // pred_fallthru
      _
    // Predicated region
    $region10: #{score.1} parent=1 // pred_check
      _
    $region11: #{score.1} parent=1 // pred_check_branch
      %14 = sbr.rel (0) target = $region13
    $region12: #{score.1} parent=1 // pred_region
      _
    $region13: #{score.1} parent=1 // pred_fallthru
      _
    %v15 = vld [vmem:[%s0] sm:$0xf]
    %s16 = scalar_lea.vmem %s0, 4
    %v17 = vld [vmem:[%s16] sm:$0xf]
    %v18 = vld [vmem:[%s1] sm:$0xf]
    %s19 = scalar_lea.vmem %s1, 4
    %v20 = vld [vmem:[%s19] sm:$0xf]
    %v21 = vld [vmem:[%s2] sm:$0x1]
    %v22 = vsub.f32 %v15, %v18
    %v23 = vsub.f32 %v17, %v20
    %v24 = vmul.f32 %v22, %v22
    %v25 = vmul.f32 %v23, %v23
    %v26 = vadd.f32 %v24, %v25
    %v27 = vrsqrt.pop %v26
    %v28 = vmul.f32 %v27, %v26
    %v29 = vmul.f32 %v28, %v27
    %v30 = vmul.f32 0.5, %v29
    %v31 = vsub.f32 1.5, %v30
    %v32 = vmul.f32 %v27, %v31
    %v33 = vmul.f32 %v26, %v32
    %vm34 = vcmp.eq.f32.partialorder %v26, inf
    %v35 = vsel %vm34, %v26, %v33
    %vm36 = vcmp.eq.f32.partialorder %v26, 0.0
    %v37 = vand.u32 %v26, 2147483648
    %v38 = vsel %vm36, %v37, %v35
    %vm39 = vcmask 551936
    %v40 = vsel %vm39, %v38, 0.0
    %41 = vadd.xlane.f32.xlu0 %v40
    %v42 = vpop.xlane.xlu0 %41
    %v43 = vrcp.pop 68.0
    %v44 = vmul.f32 68.0, %v43
    %v45 = vsub.f32 1.0, %v44
    %v46 = vmul.f32 %v43, %v45
    %v47 = vadd.f32 %v43, %v46
    %vm48 = vweird.f32 %v43
    %v49 = vsel %vm48, %v43, %v47
    %v50 = vmul.f32 %v42, %v49
    %v52 = vperm.slane %v21, 0
    %v54 = vmul.f32 %v18, %v52
    %v55 = vsel %vm39, %v54, 0.0
    %56 = vadd.xlane.f32.xlu0 %v55
    %v57 = vpop.xlane.xlu0 %56
    %v58 = vmul.f32 %v20, %v52
    %v59 = vsel %vm39, %v58, 0.0
    %60 = vadd.xlane.f32.xlu0 %v59
    %v61 = vpop.xlane.xlu0 %60
    %v62 = vmul.f32 %v57, %v57
    %v63 = vmul.f32 %v61, %v61
    %v64 = vadd.f32 %v62, %v63
    %v65 = vrsqrt.pop %v64
    %v66 = vmul.f32 %v65, %v64
    %v67 = vmul.f32 %v66, %v65
    %v68 = vmul.f32 0.5, %v67
    %v69 = vsub.f32 1.5, %v68
    %v70 = vmul.f32 %v65, %v69
    %v71 = vmul.f32 %v64, %v70
    %vm72 = vcmp.eq.f32.partialorder %v64, inf
    %v73 = vsel %vm72, %v64, %v71
    %vm74 = vcmp.eq.f32.partialorder %v64, 0.0
    %v75 = vand.u32 %v64, 2147483648
    %v76 = vsel %vm74, %v75, %v73
    %v77 = vrcp.pop %v76
    %v78 = vmul.f32 %v76, %v77
    %v79 = vsub.f32 1.0, %v78
    %v80 = vmul.f32 %v77, %v79
    %v81 = vadd.f32 %v77, %v80
    %vm82 = vweird.f32 %v76
    %vm83 = vweird.f32 %v77
    %vm84 = vmor %vm82, %vm83
    %v85 = vsel %vm84, %v77, %v81
    %v86 = vand.u32 2147483647, %v76
    %vm87 = vcmp.eq.f32.partialorder %v86, 8.507059e+37
    %v88 = vand.u32 %v76, 2147483648
    %v89 = vor.u32 1.1754944e-38, %v88
    %v90 = vsel %vm87, %v89, %v85
    %v91 = vmul.f32 %v50, %v90
    %vm92 = vcmask 3072
    %v93 = vsel %vm92, %v91, 0.0
    %94 = vadd.xlane.f32.xlu0 %v93
    %v95 = vpop.xlane.xlu0 %94
    %v96 = vrot.slane %v95, 4
    %v97 = vadd.f32 %v95, %v96
    %v98 = vrot.slane %v97, 2
    %v99 = vadd.f32 %v97, %v98
    %v100 = vrot.slane %v99, 1
    %v101 = vadd.f32 %v99, %v100
    %s102 = vtos %v101
    %v103 = vrcp.pop 4.0
    %v104 = vmul.f32 4.0, %v103
    %v105 = vsub.f32 1.0, %v104
    %v106 = vmul.f32 %v103, %v105
    %v107 = vadd.f32 %v103, %v106
    %vm108 = vweird.f32 %v103
    %v109 = vsel %vm108, %v103, %v107
    %s110 = vtos %v109
    %s111 = smul.f32 %s102, %s110
    %s112 = smul.f32 %s111, 100.0
    %s113 = scalar_lea.smem [#allocation2], 0
    %114 = sst [smem:[%s113]] %s112
    // Predicated region
    $region14: #{score.1} parent=1 // pred_check
      _
    $region15: #{score.1} parent=1 // pred_check_branch
      %116 = sbr.rel (0) target = $region17
    $region16: #{score.1} parent=1 // pred_region
      %118 = vsyncadd [#allocation3], 0
      %s120 = sshll.u32 %s3, 4
      %s121 = int_to_ptr.hbm [resolvable:$true] %s120
      %123 = dma.smem_to_hbm [#allocation2], 16, %s121, [#allocation3]
    $region17: #{score.1} parent=1 // pred_fallthru
      _
    // Predicated region
    $region18: #{score.1} parent=1 // pred_check
      _
    $region19: #{score.1} parent=1 // pred_check_branch
      %125 = sbr.rel (0) target = $region21
    $region20: #{score.1} parent=1 // pred_region
      %127 = dma.done [#allocation3], 16
    $region21: #{score.1} parent=1 // pred_fallthru
      _
    %128 = sfence
    %129 = vsyncpa [#allocation3], 1

</llo_original>
